<compile_context>
chip_gen: v7x
topology: tpu7x:2x2x1
jax: 0.10.0
libtpu: 0.0.40
codegen_flags: <defaults>
</compile_context>

<pallas_src>
import numpy as np
import jax
import jax.numpy as jnp
from jax import lax
from jax.experimental import pallas as pl
from jax.experimental.pallas import tpu as pltpu

LANE = 128


def _round_up(x, m):
    return (x + m - 1) // m * m


# --------------------------- geometry & host-side constants -------------------

def _geometry(H, W, downsample):
    Ho, Wo = (H // 2, W // 2) if downsample else (H, W)
    Hp, Wp = Ho + 2, Wo + 2
    head = _round_up(Wp + 1, LANE) - Wp      # head offset: head + Wp is lane aligned
    HEAD = head + Wp                         # lane-aligned start of the "rows>=1" slab
    SLAB = _round_up((Hp - 1) * Wp, LANE)    # per-image slab / wide-output width
    Sw = Ho * Wp                             # wide columns actually used
    max_off = 2 * Wp + 2                     # largest 3x3 tap offset
    L = _round_up(head - 1 + max_off + SLAB, LANE)   # flat buffer length per image
    return Ho, Wo, Hp, Wp, head, HEAD, SLAB, Sw, L


def _pool_operator(H, W, downsample, Wp, SLAB):
    """(H*W, SLAB) constant operator: one NCHW channel-row -> pooled, zero-padded,
    row-flattened slab.  Slab column j = ho*Wp + wo + 1 (padded rows >= 1, starting
    at the lane-aligned HEAD of the activation buffer); all other columns are 0."""
    scale = 0.25 if downsample else 1.0
    M = np.zeros((H * W, SLAB), np.float32)
    for hh in range(H):
        for ww in range(W):
            ho, wo = (hh // 2, ww // 2) if downsample else (hh, ww)
            M[hh * W + ww, ho * Wp + wo + 1] = scale
    return jnp.asarray(M)


def _valid_mask(Wp, Wo, Ho, SLAB, n_img):
    """(1, n_img*SLAB) lane mask: 1 on columns j = ho*Wp + wo + 1 (real output
    pixels), 0 on wrap-around / pad / beyond-image columns; tiled per stacked image."""
    m = np.zeros((SLAB,), np.float32)
    for ho in range(Ho):
        m[ho * Wp + 1: ho * Wp + 1 + Wo] = 1.0
    return jnp.asarray(np.tile(m, n_img)[None, :])


def _prep_weight(w_hwio, cmax):
    """(3,3,cin,cout) HWIO -> (cout, 9*cmax) lane-dense LHS, cin zero-padded to cmax."""
    cin, cout = w_hwio.shape[2], w_hwio.shape[3]
    wk = jnp.transpose(w_hwio, (3, 0, 1, 2))                     # (cout,3,3,cin)
    wk = jnp.pad(wk, ((0, 0), (0, 0), (0, 0), (0, cmax - cin)))
    return wk.reshape(cout, 9 * cmax)


# ------------------------------ fused kernel ----------------------------------

def _make_down_kernel(layer_cins, cmax, cout, Wp, head, HEAD, SLAB, L, n_img):
    n_layers = len(layer_cins)
    tap_starts = [head - 1 + dy * Wp + dx for dy in range(3) for dx in range(3)]
    R = n_img * cmax

    def kernel(*refs):
        x_ref, m_ref, mask_ref = refs[:3]
        wb_refs = refs[3:3 + 2 * n_layers]
        o_ref = refs[3 + 2 * n_layers]
        buf_ref, col_ref = refs[3 + 2 * n_layers + 1:]

        # ---- pool + zero-pad + flatten for the whole lane-stacked batch ------
        # One constant-operator matmul fills the lane-aligned slab of every image
        # (pad positions are zero columns of the operator, pad channels are zero
        # input rows); head (incl. top pad row) and tail are zeroed once with
        # full-vreg stores and never touched again.
        buf_ref[:, 0:HEAD] = jnp.zeros((R, HEAD), jnp.float32)
        buf_ref[:, HEAD + SLAB:L] = jnp.zeros((R, L - HEAD - SLAB), jnp.float32)
        buf_ref[:, HEAD:HEAD + SLAB] = jnp.dot(
            x_ref[0], m_ref[...], preferred_element_type=jnp.float32)

        mask = mask_ref[...]                          # (1, n_img*SLAB)

        for l in range(n_layers):
            w_ref, b_ref = wb_refs[2 * l], wb_refs[2 * l + 1]
            # im2col: every 3x3 tap of every image is one (cmax, SLAB) copy out of
            # the flat buffer into an aligned full-vreg col slot (no masked stores,
            # no zero-fill; unused-channel rows meet zero-padded weight columns).
            for t, start in enumerate(tap_starts):
                for n in range(n_img):
                    col_ref[t * cmax:(t + 1) * cmax, n * SLAB:(n + 1) * SLAB] = \
                        buf_ref[n * cmax:(n + 1) * cmax, start:start + SLAB]
            # one lane-dense matmul per layer over the whole stacked batch:
            # (cout, 9*cmax) x (9*cmax, n_img*SLAB)
            acc = jnp.dot(w_ref[...], col_ref[...],
                          preferred_element_type=jnp.float32)
            act = jnp.maximum(acc + b_ref[...], 0.0)          # bias + ReLU
            if l + 1 < n_layers:
                # lane-aligned, full-vreg writeback: the masked slab IS the next
                # layer's zero-padded input (mask zeroes wrap/pad/bottom columns).
                masked = act * mask
                for n in range(n_img):
                    buf_ref[n * cmax:n * cmax + cout, HEAD:HEAD + SLAB] = \
                        masked[:, n * SLAB:(n + 1) * SLAB]
            else:
                for n in range(n_img):                        # 128-wide aligned stores
                    o_ref[n] = act[:, n * SLAB:(n + 1) * SLAB].astype(o_ref.dtype)

    return kernel


# --------------------------------- wrapper -------------------------------------

def down_forward(x_nchw, params, downsample=True, max_stack_lanes=512):
    """Pallas implementation of down.forward.  x_nchw: (N, Cin, H, W) f32.
    params: list of (w_hwio (3,3,cin,cout), b (cout,)) for each conv+ReLU layer."""
    N, Cin, H, W = x_nchw.shape
    cout = params[0][0].shape[-1]
    layer_cins = [p[0].shape[2] for p in params]
    assert layer_cins[0] == Cin
    assert all(p[0].shape[-1] == cout for p in params)
    cmax = max([cout] + layer_cins)

    Ho, Wo, Hp, Wp, head, HEAD, SLAB, Sw, L = _geometry(H, W, downsample)

    # Images stacked along lanes per grid step (whole batch in one step here).
    n_img = 1
    for d in range(N, 0, -1):
        if N % d == 0 and d * SLAB <= max_stack_lanes:
            n_img = d
            break
    G = N // n_img
    R = n_img * cmax

    # Host-side layout glue (tiny): pad channels to cmax and group images per step
    # so the in-kernel pool matmul writes one aligned (R, SLAB) slab per step.
    x_flat = x_nchw.reshape(N, Cin, H * W)
    x_flat = jnp.pad(x_flat, ((0, 0), (0, cmax - Cin), (0, 0)))
    x_stacked = x_flat.reshape(G, R, H * W)

    M = _pool_operator(H, W, downsample, Wp, SLAB)
    mask = _valid_mask(Wp, Wo, Ho, SLAB, n_img)
    w_list = [_prep_weight(w, cmax) for w, _ in params]
    b_list = [b.reshape(cout, 1) for _, b in params]

    kernel = _make_down_kernel(layer_cins, cmax, cout, Wp, head, HEAD, SLAB, L, n_img)

    const2 = lambda g: (0, 0)
    in_specs = [
        pl.BlockSpec((1, R, H * W), lambda g: (g, 0, 0)),
        pl.BlockSpec((H * W, SLAB), const2),
        pl.BlockSpec((1, n_img * SLAB), const2),
    ]
    args = [x_stacked, M, mask]
    for w2, b2 in zip(w_list, b_list):
        in_specs.append(pl.BlockSpec((cout, 9 * cmax), const2))
        in_specs.append(pl.BlockSpec((cout, 1), const2))
        args += [w2, b2]

    out_wide = pl.pallas_call(
        kernel,
        out_shape=jax.ShapeDtypeStruct((N, cout, SLAB), x_nchw.dtype),
        grid=(G,),
        in_specs=in_specs,
        out_specs=pl.BlockSpec((n_img, cout, SLAB), lambda g: (g, 0, 0)),
        scratch_shapes=[
            pltpu.VMEM((R, L), jnp.float32),                     # flat padded activations
            pltpu.VMEM((9 * cmax, n_img * SLAB), jnp.float32),   # im2col buffer
        ],
        compiler_params=pltpu.CompilerParams(
            dimension_semantics=("parallel",)),     # shards a longer grid across v7x TCs
    )(*args)

    # Drop the wrap-around / pad columns of the wide output: -> NCHW directly.
    out = out_wide[:, :, :Sw].reshape(N, cout, Ho, Wp)[:, :, :, 1:Wo + 1]
    return out


# --------------------------------- reference -----------------------------------

def down_reference(x, params, downsample=True):
    if downsample:
        N, C, H, W = x.shape
        x = x.reshape(N, C, H // 2, 2, W // 2, 2).mean(axis=(3, 5))
    for w, b in params:
        x = lax.conv_general_dilated(
            x, w, window_strides=(1, 1), padding="SAME",
            dimension_numbers=("NCHW", "HWIO", "NCHW"),
            precision=lax.Precision.HIGHEST)
        x = jnp.maximum(x + b.reshape(1, -1, 1, 1), 0.0)
    return x


# ----------------------------------- main ----------------------------------------

def _init_conv(key, cin, cout):
    """Deterministic synthetic params, mimicking PyTorch Conv2d default init."""
    kw, kb = jax.random.split(key)
    bound = 1.0 / np.sqrt(cin * 9)
    w = jax.random.uniform(kw, (3, 3, cin, cout), jnp.float32, -bound, bound)
    b = jax.random.uniform(kb, (cout,), jnp.float32, -bound, bound)
    return w, b


if __name__ == "__main__":
    # down(block=conv3x3+ReLU, in_ch=4, out_ch=8, rep=2, downsample=True, bn=False)
    N, in_ch, H, W = 2, 4, 16, 16
    out_ch, rep = 8, 2

    key = jax.random.PRNGKey(0)
    kx, *pkeys = jax.random.split(key, 1 + rep)
    x = jax.random.normal(kx, (N, in_ch, H, W), jnp.float32)

    params = [_init_conv(pkeys[0], in_ch, out_ch)]
    for r in range(1, rep):
        params.append(_init_conv(pkeys[r], out_ch, out_ch))

    out = down_forward(x, params, downsample=True)
    out = jax.block_until_ready(out)
    assert out.shape == (N, out_ch, H // 2, W // 2), out.shape

    ref = down_reference(x, params, downsample=True)
    np.testing.assert_allclose(np.asarray(out), np.asarray(ref),
                               rtol=2e-3, atol=2e-3)
    print("KERNEL_OK")
</pallas_src>

<mosaic_0001>
module attributes {stable_mosaic.version = 11 : i64} {
  func.func @kernel(%arg0: i32, %arg1: memref<1x16x256xf32, #tpu.memory_space<vmem>>, %arg2: memref<256x128xf32, #tpu.memory_space<vmem>>, %arg3: memref<1x256xf32, #tpu.memory_space<vmem>>, %arg4: memref<8x72xf32, #tpu.memory_space<vmem>>, %arg5: memref<8x1xf32, #tpu.memory_space<vmem>>, %arg6: memref<8x72xf32, #tpu.memory_space<vmem>>, %arg7: memref<8x1xf32, #tpu.memory_space<vmem>>, %arg8: memref<2x8x128xf32, #tpu.memory_space<vmem>>, %arg9: memref<16x384xf32, #tpu.memory_space<vmem>>, %arg10: memref<72x256xf32, #tpu.memory_space<vmem>>) attributes {dimension_semantics = [#tpu.dimension_semantics<parallel>], iteration_bounds = array<i64: 1>, scalar_prefetch = 0 : i64, scratch_operands = 2 : i64, tpu.core_type = #tpu.core_type<tc>, window_params = [{transform_indices = @transform_0, window_bounds = array<i64: 1, 16, 256>}, {pipeline_mode = #tpu.pipeline_mode<synchronous>, transform_indices = @transform_1, window_bounds = array<i64: 256, 128>}, {pipeline_mode = #tpu.pipeline_mode<synchronous>, transform_indices = @transform_2, window_bounds = array<i64: 1, 256>}, {pipeline_mode = #tpu.pipeline_mode<synchronous>, transform_indices = @transform_3, window_bounds = array<i64: 8, 72>}, {pipeline_mode = #tpu.pipeline_mode<synchronous>, transform_indices = @transform_4, window_bounds = array<i64: 8, 1>}, {pipeline_mode = #tpu.pipeline_mode<synchronous>, transform_indices = @transform_5, window_bounds = array<i64: 8, 72>}, {pipeline_mode = #tpu.pipeline_mode<synchronous>, transform_indices = @transform_6, window_bounds = array<i64: 8, 1>}, {transform_indices = @transform_7, window_bounds = array<i64: 2, 8, 128>}]} {
    %cst = arith.constant 0.000000e+00 : f32
    %0 = vector.broadcast %cst : f32 to vector<16x128xf32>
    %c0 = arith.constant 0 : index
    %c0_0 = arith.constant 0 : index
    %1 = vector.load %arg9[%c0, %c0_0] : memref<16x384xf32, #tpu.memory_space<vmem>>, vector<16x128xf32>
    tpu.vector_store %arg9[%c0, %c0_0], %0 {strides = array<i32>} : memref<16x384xf32, #tpu.memory_space<vmem>>, vector<16x128xf32>,
    %cst_1 = arith.constant 0.000000e+00 : f32
    %2 = vector.broadcast %cst_1 : f32 to vector<16x128xf32>
    %c0_2 = arith.constant 0 : index
    %c256 = arith.constant 256 : index
    %3 = vector.load %arg9[%c0_2, %c256] : memref<16x384xf32, #tpu.memory_space<vmem>>, vector<16x128xf32>
    tpu.vector_store %arg9[%c0_2, %c256], %2 {strides = array<i32>} : memref<16x384xf32, #tpu.memory_space<vmem>>, vector<16x128xf32>,
    %c0_3 = arith.constant 0 : index
    %c0_4 = arith.constant 0 : index
    %c0_5 = arith.constant 0 : index
    %4 = vector.load %arg1[%c0_3, %c0_4, %c0_5] : memref<1x16x256xf32, #tpu.memory_space<vmem>>, vector<1x16x256xf32>
    %5 = vector.shape_cast %4 : vector<1x16x256xf32> to vector<16x256xf32>
    %c0_6 = arith.constant 0 : index
    %c0_7 = arith.constant 0 : index
    %6 = vector.load %arg2[%c0_6, %c0_7] : memref<256x128xf32, #tpu.memory_space<vmem>>, vector<256x128xf32>
    %cst_8 = arith.constant dense<0.000000e+00> : vector<16x128xf32>
    %7 = tpu.matmul %5, %6, %cst_8 {dimension_numbers = #tpu.dot_dimension_numbers<[1], [0], [0], [1], [0, 0, 1, 1], [], []>} : vector<16x256xf32>, vector<256x128xf32>, vector<16x128xf32> -> vector<16x128xf32>
    %c0_9 = arith.constant 0 : index
    %c128 = arith.constant 128 : index
    %8 = vector.load %arg9[%c0_9, %c128] : memref<16x384xf32, #tpu.memory_space<vmem>>, vector<16x128xf32>
    tpu.vector_store %arg9[%c0_9, %c128], %7 {strides = array<i32>} : memref<16x384xf32, #tpu.memory_space<vmem>>, vector<16x128xf32>,
    %c0_10 = arith.constant 0 : index
    %c0_11 = arith.constant 0 : index
    %9 = vector.load %arg3[%c0_10, %c0_11] : memref<1x256xf32, #tpu.memory_space<vmem>>, vector<1x256xf32>
    %c0_12 = arith.constant 0 : index
    %c117 = arith.constant 117 : index
    %10 = vector.load %arg9[%c0_12, %c117] : memref<16x384xf32, #tpu.memory_space<vmem>>, vector<8x128xf32>
    %c0_13 = arith.constant 0 : index
    %c0_14 = arith.constant 0 : index
    %11 = vector.load %arg10[%c0_13, %c0_14] : memref<72x256xf32, #tpu.memory_space<vmem>>, vector<8x128xf32>
    tpu.vector_store %arg10[%c0_13, %c0_14], %10 {strides = array<i32>} : memref<72x256xf32, #tpu.memory_space<vmem>>, vector<8x128xf32>,
    %c8 = arith.constant 8 : index
    %c117_15 = arith.constant 117 : index
    %12 = vector.load %arg9[%c8, %c117_15] : memref<16x384xf32, #tpu.memory_space<vmem>>, vector<8x128xf32>
    %c0_16 = arith.constant 0 : index
    %c128_17 = arith.constant 128 : index
    %13 = vector.load %arg10[%c0_16, %c128_17] : memref<72x256xf32, #tpu.memory_space<vmem>>, vector<8x128xf32>
    tpu.vector_store %arg10[%c0_16, %c128_17], %12 {strides = array<i32>} : memref<72x256xf32, #tpu.memory_space<vmem>>, vector<8x128xf32>,
    %c0_18 = arith.constant 0 : index
    %c118 = arith.constant 118 : index
    %14 = vector.load %arg9[%c0_18, %c118] : memref<16x384xf32, #tpu.memory_space<vmem>>, vector<8x128xf32>
    %c8_19 = arith.constant 8 : index
    %c0_20 = arith.constant 0 : index
    %15 = vector.load %arg10[%c8_19, %c0_20] : memref<72x256xf32, #tpu.memory_space<vmem>>, vector<8x128xf32>
    tpu.vector_store %arg10[%c8_19, %c0_20], %14 {strides = array<i32>} : memref<72x256xf32, #tpu.memory_space<vmem>>, vector<8x128xf32>,
    %c8_21 = arith.constant 8 : index
    %c118_22 = arith.constant 118 : index
    %16 = vector.load %arg9[%c8_21, %c118_22] : memref<16x384xf32, #tpu.memory_space<vmem>>, vector<8x128xf32>
    %c8_23 = arith.constant 8 : index
    %c128_24 = arith.constant 128 : index
    %17 = vector.load %arg10[%c8_23, %c128_24] : memref<72x256xf32, #tpu.memory_space<vmem>>, vector<8x128xf32>
    tpu.vector_store %arg10[%c8_23, %c128_24], %16 {strides = array<i32>} : memref<72x256xf32, #tpu.memory_space<vmem>>, vector<8x128xf32>,
    %c0_25 = arith.constant 0 : index
    %c119 = arith.constant 119 : index
    %18 = vector.load %arg9[%c0_25, %c119] : memref<16x384xf32, #tpu.memory_space<vmem>>, vector<8x128xf32>
    %c16 = arith.constant 16 : index
    %c0_26 = arith.constant 0 : index
    %19 = vector.load %arg10[%c16, %c0_26] : memref<72x256xf32, #tpu.memory_space<vmem>>, vector<8x128xf32>
    tpu.vector_store %arg10[%c16, %c0_26], %18 {strides = array<i32>} : memref<72x256xf32, #tpu.memory_space<vmem>>, vector<8x128xf32>,
    %c8_27 = arith.constant 8 : index
    %c119_28 = arith.constant 119 : index
    %20 = vector.load %arg9[%c8_27, %c119_28] : memref<16x384xf32, #tpu.memory_space<vmem>>, vector<8x128xf32>
    %c16_29 = arith.constant 16 : index
    %c128_30 = arith.constant 128 : index
    %21 = vector.load %arg10[%c16_29, %c128_30] : memref<72x256xf32, #tpu.memory_space<vmem>>, vector<8x128xf32>
    tpu.vector_store %arg10[%c16_29, %c128_30], %20 {strides = array<i32>} : memref<72x256xf32, #tpu.memory_space<vmem>>, vector<8x128xf32>,
    %c0_31 = arith.constant 0 : index
    %c127 = arith.constant 127 : index
    %22 = vector.load %arg9[%c0_31, %c127] : memref<16x384xf32, #tpu.memory_space<vmem>>, vector<8x128xf32>
    %c24 = arith.constant 24 : index
    %c0_32 = arith.constant 0 : index
    %23 = vector.load %arg10[%c24, %c0_32] : memref<72x256xf32, #tpu.memory_space<vmem>>, vector<8x128xf32>
    tpu.vector_store %arg10[%c24, %c0_32], %22 {strides = array<i32>} : memref<72x256xf32, #tpu.memory_space<vmem>>, vector<8x128xf32>,
    %c8_33 = arith.constant 8 : index
    %c127_34 = arith.constant 127 : index
    %24 = vector.load %arg9[%c8_33, %c127_34] : memref<16x384xf32, #tpu.memory_space<vmem>>, vector<8x128xf32>
    %c24_35 = arith.constant 24 : index
    %c128_36 = arith.constant 128 : index
    %25 = vector.load %arg10[%c24_35, %c128_36] : memref<72x256xf32, #tpu.memory_space<vmem>>, vector<8x128xf32>
    tpu.vector_store %arg10[%c24_35, %c128_36], %24 {strides = array<i32>} : memref<72x256xf32, #tpu.memory_space<vmem>>, vector<8x128xf32>,
    %c0_37 = arith.constant 0 : index
    %c128_38 = arith.constant 128 : index
    %26 = vector.load %arg9[%c0_37, %c128_38] : memref<16x384xf32, #tpu.memory_space<vmem>>, vector<8x128xf32>
    %c32 = arith.constant 32 : index
    %c0_39 = arith.constant 0 : index
    %27 = vector.load %arg10[%c32, %c0_39] : memref<72x256xf32, #tpu.memory_space<vmem>>, vector<8x128xf32>
    tpu.vector_store %arg10[%c32, %c0_39], %26 {strides = array<i32>} : memref<72x256xf32, #tpu.memory_space<vmem>>, vector<8x128xf32>,
    %c8_40 = arith.constant 8 : index
    %c128_41 = arith.constant 128 : index
    %28 = vector.load %arg9[%c8_40, %c128_41] : memref<16x384xf32, #tpu.memory_space<vmem>>, vector<8x128xf32>
    %c32_42 = arith.constant 32 : index
    %c128_43 = arith.constant 128 : index
    %29 = vector.load %arg10[%c32_42, %c128_43] : memref<72x256xf32, #tpu.memory_space<vmem>>, vector<8x128xf32>
    tpu.vector_store %arg10[%c32_42, %c128_43], %28 {strides = array<i32>} : memref<72x256xf32, #tpu.memory_space<vmem>>, vector<8x128xf32>,
    %c0_44 = arith.constant 0 : index
    %c129 = arith.constant 129 : index
    %30 = vector.load %arg9[%c0_44, %c129] : memref<16x384xf32, #tpu.memory_space<vmem>>, vector<8x128xf32>
    %c40 = arith.constant 40 : index
    %c0_45 = arith.constant 0 : index
    %31 = vector.load %arg10[%c40, %c0_45] : memref<72x256xf32, #tpu.memory_space<vmem>>, vector<8x128xf32>
    tpu.vector_store %arg10[%c40, %c0_45], %30 {strides = array<i32>} : memref<72x256xf32, #tpu.memory_space<vmem>>, vector<8x128xf32>,
    %c8_46 = arith.constant 8 : index
    %c129_47 = arith.constant 129 : index
    %32 = vector.load %arg9[%c8_46, %c129_47] : memref<16x384xf32, #tpu.memory_space<vmem>>, vector<8x128xf32>
    %c40_48 = arith.constant 40 : index
    %c128_49 = arith.constant 128 : index
    %33 = vector.load %arg10[%c40_48, %c128_49] : memref<72x256xf32, #tpu.memory_space<vmem>>, vector<8x128xf32>
    tpu.vector_store %arg10[%c40_48, %c128_49], %32 {strides = array<i32>} : memref<72x256xf32, #tpu.memory_space<vmem>>, vector<8x128xf32>,
    %c0_50 = arith.constant 0 : index
    %c137 = arith.constant 137 : index
    %34 = vector.load %arg9[%c0_50, %c137] : memref<16x384xf32, #tpu.memory_space<vmem>>, vector<8x128xf32>
    %c48 = arith.constant 48 : index
    %c0_51 = arith.constant 0 : index
    %35 = vector.load %arg10[%c48, %c0_51] : memref<72x256xf32, #tpu.memory_space<vmem>>, vector<8x128xf32>
    tpu.vector_store %arg10[%c48, %c0_51], %34 {strides = array<i32>} : memref<72x256xf32, #tpu.memory_space<vmem>>, vector<8x128xf32>,
    %c8_52 = arith.constant 8 : index
    %c137_53 = arith.constant 137 : index
    %36 = vector.load %arg9[%c8_52, %c137_53] : memref<16x384xf32, #tpu.memory_space<vmem>>, vector<8x128xf32>
    %c48_54 = arith.constant 48 : index
    %c128_55 = arith.constant 128 : index
    %37 = vector.load %arg10[%c48_54, %c128_55] : memref<72x256xf32, #tpu.memory_space<vmem>>, vector<8x128xf32>
    tpu.vector_store %arg10[%c48_54, %c128_55], %36 {strides = array<i32>} : memref<72x256xf32, #tpu.memory_space<vmem>>, vector<8x128xf32>,
    %c0_56 = arith.constant 0 : index
    %c138 = arith.constant 138 : index
    %38 = vector.load %arg9[%c0_56, %c138] : memref<16x384xf32, #tpu.memory_space<vmem>>, vector<8x128xf32>
    %c56 = arith.constant 56 : index
    %c0_57 = arith.constant 0 : index
    %39 = vector.load %arg10[%c56, %c0_57] : memref<72x256xf32, #tpu.memory_space<vmem>>, vector<8x128xf32>
    tpu.vector_store %arg10[%c56, %c0_57], %38 {strides = array<i32>} : memref<72x256xf32, #tpu.memory_space<vmem>>, vector<8x128xf32>,
    %c8_58 = arith.constant 8 : index
    %c138_59 = arith.constant 138 : index
    %40 = vector.load %arg9[%c8_58, %c138_59] : memref<16x384xf32, #tpu.memory_space<vmem>>, vector<8x128xf32>
    %c56_60 = arith.constant 56 : index
    %c128_61 = arith.constant 128 : index
    %41 = vector.load %arg10[%c56_60, %c128_61] : memref<72x256xf32, #tpu.memory_space<vmem>>, vector<8x128xf32>
    tpu.vector_store %arg10[%c56_60, %c128_61], %40 {strides = array<i32>} : memref<72x256xf32, #tpu.memory_space<vmem>>, vector<8x128xf32>,
    %c0_62 = arith.constant 0 : index
    %c139 = arith.constant 139 : index
    %42 = vector.load %arg9[%c0_62, %c139] : memref<16x384xf32, #tpu.memory_space<vmem>>, vector<8x128xf32>
    %c64 = arith.constant 64 : index
    %c0_63 = arith.constant 0 : index
    %43 = vector.load %arg10[%c64, %c0_63] : memref<72x256xf32, #tpu.memory_space<vmem>>, vector<8x128xf32>
    tpu.vector_store %arg10[%c64, %c0_63], %42 {strides = array<i32>} : memref<72x256xf32, #tpu.memory_space<vmem>>, vector<8x128xf32>,
    %c8_64 = arith.constant 8 : index
    %c139_65 = arith.constant 139 : index
    %44 = vector.load %arg9[%c8_64, %c139_65] : memref<16x384xf32, #tpu.memory_space<vmem>>, vector<8x128xf32>
    %c64_66 = arith.constant 64 : index
    %c128_67 = arith.constant 128 : index
    %45 = vector.load %arg10[%c64_66, %c128_67] : memref<72x256xf32, #tpu.memory_space<vmem>>, vector<8x128xf32>
    tpu.vector_store %arg10[%c64_66, %c128_67], %44 {strides = array<i32>} : memref<72x256xf32, #tpu.memory_space<vmem>>, vector<8x128xf32>,
    %c0_68 = arith.constant 0 : index
    %c0_69 = arith.constant 0 : index
    %46 = vector.load %arg4[%c0_68, %c0_69] : memref<8x72xf32, #tpu.memory_space<vmem>>, vector<8x72xf32>
    %c0_70 = arith.constant 0 : index
    %c0_71 = arith.constant 0 : index
    %47 = vector.load %arg10[%c0_70, %c0_71] : memref<72x256xf32, #tpu.memory_space<vmem>>, vector<72x256xf32>
    %cst_72 = arith.constant dense<0.000000e+00> : vector<8x256xf32>
    %48 = tpu.matmul %46, %47, %cst_72 {dimension_numbers = #tpu.dot_dimension_numbers<[1], [0], [0], [1], [0, 0, 1, 1], [], []>} : vector<8x72xf32>, vector<72x256xf32>, vector<8x256xf32> -> vector<8x256xf32>
    %c0_73 = arith.constant 0 : index
    %c0_74 = arith.constant 0 : index
    %49 = vector.load %arg5[%c0_73, %c0_74] : memref<8x1xf32, #tpu.memory_space<vmem>>, vector<8x1xf32>
    %50 = vector.broadcast %49 : vector<8x1xf32> to vector<8x256xf32>
    %51 = arith.addf %48, %50 : vector<8x256xf32>
    %cst_75 = arith.constant 0.000000e+00 : f32
    %52 = vector.broadcast %cst_75 : f32 to vector<8x256xf32>
    %53 = arith.maximumf %51, %52 : vector<8x256xf32>
    %54 = vector.broadcast %9 : vector<1x256xf32> to vector<8x256xf32>
    %55 = arith.mulf %53, %54 : vector<8x256xf32>
    %56 = vector.extract_strided_slice %55 {offsets = [0, 0], sizes = [8, 128], strides = [1, 1]} : vector<8x256xf32> to vector<8x128xf32>
    %c0_76 = arith.constant 0 : index
    %c128_77 = arith.constant 128 : index
    %57 = vector.load %arg9[%c0_76, %c128_77] : memref<16x384xf32, #tpu.memory_space<vmem>>, vector<8x128xf32>
    tpu.vector_store %arg9[%c0_76, %c128_77], %56 {strides = array<i32>} : memref<16x384xf32, #tpu.memory_space<vmem>>, vector<8x128xf32>,
    %58 = vector.extract_strided_slice %55 {offsets = [0, 128], sizes = [8, 128], strides = [1, 1]} : vector<8x256xf32> to vector<8x128xf32>
    %c8_78 = arith.constant 8 : index
    %c128_79 = arith.constant 128 : index
    %59 = vector.load %arg9[%c8_78, %c128_79] : memref<16x384xf32, #tpu.memory_space<vmem>>, vector<8x128xf32>
    tpu.vector_store %arg9[%c8_78, %c128_79], %58 {strides = array<i32>} : memref<16x384xf32, #tpu.memory_space<vmem>>, vector<8x128xf32>,
    %c0_80 = arith.constant 0 : index
    %c117_81 = arith.constant 117 : index
    %60 = vector.load %arg9[%c0_80, %c117_81] : memref<16x384xf32, #tpu.memory_space<vmem>>, vector<8x128xf32>
    %c0_82 = arith.constant 0 : index
    %c0_83 = arith.constant 0 : index
    %61 = vector.load %arg10[%c0_82, %c0_83] : memref<72x256xf32, #tpu.memory_space<vmem>>, vector<8x128xf32>
    tpu.vector_store %arg10[%c0_82, %c0_83], %60 {strides = array<i32>} : memref<72x256xf32, #tpu.memory_space<vmem>>, vector<8x128xf32>,
    %c8_84 = arith.constant 8 : index
    %c117_85 = arith.constant 117 : index
    %62 = vector.load %arg9[%c8_84, %c117_85] : memref<16x384xf32, #tpu.memory_space<vmem>>, vector<8x128xf32>
    %c0_86 = arith.constant 0 : index
    %c128_87 = arith.constant 128 : index
    %63 = vector.load %arg10[%c0_86, %c128_87] : memref<72x256xf32, #tpu.memory_space<vmem>>, vector<8x128xf32>
    tpu.vector_store %arg10[%c0_86, %c128_87], %62 {strides = array<i32>} : memref<72x256xf32, #tpu.memory_space<vmem>>, vector<8x128xf32>,
    %c0_88 = arith.constant 0 : index
    %c118_89 = arith.constant 118 : index
    %64 = vector.load %arg9[%c0_88, %c118_89] : memref<16x384xf32, #tpu.memory_space<vmem>>, vector<8x128xf32>
    %c8_90 = arith.constant 8 : index
    %c0_91 = arith.constant 0 : index
    %65 = vector.load %arg10[%c8_90, %c0_91] : memref<72x256xf32, #tpu.memory_space<vmem>>, vector<8x128xf32>
    tpu.vector_store %arg10[%c8_90, %c0_91], %64 {strides = array<i32>} : memref<72x256xf32, #tpu.memory_space<vmem>>, vector<8x128xf32>,
    %c8_92 = arith.constant 8 : index
    %c118_93 = arith.constant 118 : index
    %66 = vector.load %arg9[%c8_92, %c118_93] : memref<16x384xf32, #tpu.memory_space<vmem>>, vector<8x128xf32>
    %c8_94 = arith.constant 8 : index
    %c128_95 = arith.constant 128 : index
    %67 = vector.load %arg10[%c8_94, %c128_95] : memref<72x256xf32, #tpu.memory_space<vmem>>, vector<8x128xf32>
    tpu.vector_store %arg10[%c8_94, %c128_95], %66 {strides = array<i32>} : memref<72x256xf32, #tpu.memory_space<vmem>>, vector<8x128xf32>,
    %c0_96 = arith.constant 0 : index
    %c119_97 = arith.constant 119 : index
    %68 = vector.load %arg9[%c0_96, %c119_97] : memref<16x384xf32, #tpu.memory_space<vmem>>, vector<8x128xf32>
    %c16_98 = arith.constant 16 : index
    %c0_99 = arith.constant 0 : index
    %69 = vector.load %arg10[%c16_98, %c0_99] : memref<72x256xf32, #tpu.memory_space<vmem>>, vector<8x128xf32>
    tpu.vector_store %arg10[%c16_98, %c0_99], %68 {strides = array<i32>} : memref<72x256xf32, #tpu.memory_space<vmem>>, vector<8x128xf32>,
    %c8_100 = arith.constant 8 : index
    %c119_101 = arith.constant 119 : index
    %70 = vector.load %arg9[%c8_100, %c119_101] : memref<16x384xf32, #tpu.memory_space<vmem>>, vector<8x128xf32>
    %c16_102 = arith.constant 16 : index
    %c128_103 = arith.constant 128 : index
    %71 = vector.load %arg10[%c16_102, %c128_103] : memref<72x256xf32, #tpu.memory_space<vmem>>, vector<8x128xf32>
    tpu.vector_store %arg10[%c16_102, %c128_103], %70 {strides = array<i32>} : memref<72x256xf32, #tpu.memory_space<vmem>>, vector<8x128xf32>,
    %c0_104 = arith.constant 0 : index
    %c127_105 = arith.constant 127 : index
    %72 = vector.load %arg9[%c0_104, %c127_105] : memref<16x384xf32, #tpu.memory_space<vmem>>, vector<8x128xf32>
    %c24_106 = arith.constant 24 : index
    %c0_107 = arith.constant 0 : index
    %73 = vector.load %arg10[%c24_106, %c0_107] : memref<72x256xf32, #tpu.memory_space<vmem>>, vector<8x128xf32>
    tpu.vector_store %arg10[%c24_106, %c0_107], %72 {strides = array<i32>} : memref<72x256xf32, #tpu.memory_space<vmem>>, vector<8x128xf32>,
    %c8_108 = arith.constant 8 : index
    %c127_109 = arith.constant 127 : index
    %74 = vector.load %arg9[%c8_108, %c127_109] : memref<16x384xf32, #tpu.memory_space<vmem>>, vector<8x128xf32>
    %c24_110 = arith.constant 24 : index
    %c128_111 = arith.constant 128 : index
    %75 = vector.load %arg10[%c24_110, %c128_111] : memref<72x256xf32, #tpu.memory_space<vmem>>, vector<8x128xf32>
    tpu.vector_store %arg10[%c24_110, %c128_111], %74 {strides = array<i32>} : memref<72x256xf32, #tpu.memory_space<vmem>>, vector<8x128xf32>,
    %c0_112 = arith.constant 0 : index
    %c128_113 = arith.constant 128 : index
    %76 = vector.load %arg9[%c0_112, %c128_113] : memref<16x384xf32, #tpu.memory_space<vmem>>, vector<8x128xf32>
    %c32_114 = arith.constant 32 : index
    %c0_115 = arith.constant 0 : index
    %77 = vector.load %arg10[%c32_114, %c0_115] : memref<72x256xf32, #tpu.memory_space<vmem>>, vector<8x128xf32>
    tpu.vector_store %arg10[%c32_114, %c0_115], %76 {strides = array<i32>} : memref<72x256xf32, #tpu.memory_space<vmem>>, vector<8x128xf32>,
    %c8_116 = arith.constant 8 : index
    %c128_117 = arith.constant 128 : index
    %78 = vector.load %arg9[%c8_116, %c128_117] : memref<16x384xf32, #tpu.memory_space<vmem>>, vector<8x128xf32>
    %c32_118 = arith.constant 32 : index
    %c128_119 = arith.constant 128 : index
    %79 = vector.load %arg10[%c32_118, %c128_119] : memref<72x256xf32, #tpu.memory_space<vmem>>, vector<8x128xf32>
    tpu.vector_store %arg10[%c32_118, %c128_119], %78 {strides = array<i32>} : memref<72x256xf32, #tpu.memory_space<vmem>>, vector<8x128xf32>,
    %c0_120 = arith.constant 0 : index
    %c129_121 = arith.constant 129 : index
    %80 = vector.load %arg9[%c0_120, %c129_121] : memref<16x384xf32, #tpu.memory_space<vmem>>, vector<8x128xf32>
    %c40_122 = arith.constant 40 : index
    %c0_123 = arith.constant 0 : index
    %81 = vector.load %arg10[%c40_122, %c0_123] : memref<72x256xf32, #tpu.memory_space<vmem>>, vector<8x128xf32>
    tpu.vector_store %arg10[%c40_122, %c0_123], %80 {strides = array<i32>} : memref<72x256xf32, #tpu.memory_space<vmem>>, vector<8x128xf32>,
    %c8_124 = arith.constant 8 : index
    %c129_125 = arith.constant 129 : index
    %82 = vector.load %arg9[%c8_124, %c129_125] : memref<16x384xf32, #tpu.memory_space<vmem>>, vector<8x128xf32>
    %c40_126 = arith.constant 40 : index
    %c128_127 = arith.constant 128 : index
    %83 = vector.load %arg10[%c40_126, %c128_127] : memref<72x256xf32, #tpu.memory_space<vmem>>, vector<8x128xf32>
    tpu.vector_store %arg10[%c40_126, %c128_127], %82 {strides = array<i32>} : memref<72x256xf32, #tpu.memory_space<vmem>>, vector<8x128xf32>,
    %c0_128 = arith.constant 0 : index
    %c137_129 = arith.constant 137 : index
    %84 = vector.load %arg9[%c0_128, %c137_129] : memref<16x384xf32, #tpu.memory_space<vmem>>, vector<8x128xf32>
    %c48_130 = arith.constant 48 : index
    %c0_131 = arith.constant 0 : index
    %85 = vector.load %arg10[%c48_130, %c0_131] : memref<72x256xf32, #tpu.memory_space<vmem>>, vector<8x128xf32>
    tpu.vector_store %arg10[%c48_130, %c0_131], %84 {strides = array<i32>} : memref<72x256xf32, #tpu.memory_space<vmem>>, vector<8x128xf32>,
    %c8_132 = arith.constant 8 : index
    %c137_133 = arith.constant 137 : index
    %86 = vector.load %arg9[%c8_132, %c137_133] : memref<16x384xf32, #tpu.memory_space<vmem>>, vector<8x128xf32>
    %c48_134 = arith.constant 48 : index
    %c128_135 = arith.constant 128 : index
    %87 = vector.load %arg10[%c48_134, %c128_135] : memref<72x256xf32, #tpu.memory_space<vmem>>, vector<8x128xf32>
    tpu.vector_store %arg10[%c48_134, %c128_135], %86 {strides = array<i32>} : memref<72x256xf32, #tpu.memory_space<vmem>>, vector<8x128xf32>,
    %c0_136 = arith.constant 0 : index
    %c138_137 = arith.constant 138 : index
    %88 = vector.load %arg9[%c0_136, %c138_137] : memref<16x384xf32, #tpu.memory_space<vmem>>, vector<8x128xf32>
    %c56_138 = arith.constant 56 : index
    %c0_139 = arith.constant 0 : index
    %89 = vector.load %arg10[%c56_138, %c0_139] : memref<72x256xf32, #tpu.memory_space<vmem>>, vector<8x128xf32>
    tpu.vector_store %arg10[%c56_138, %c0_139], %88 {strides = array<i32>} : memref<72x256xf32, #tpu.memory_space<vmem>>, vector<8x128xf32>,
    %c8_140 = arith.constant 8 : index
    %c138_141 = arith.constant 138 : index
    %90 = vector.load %arg9[%c8_140, %c138_141] : memref<16x384xf32, #tpu.memory_space<vmem>>, vector<8x128xf32>
    %c56_142 = arith.constant 56 : index
    %c128_143 = arith.constant 128 : index
    %91 = vector.load %arg10[%c56_142, %c128_143] : memref<72x256xf32, #tpu.memory_space<vmem>>, vector<8x128xf32>
    tpu.vector_store %arg10[%c56_142, %c128_143], %90 {strides = array<i32>} : memref<72x256xf32, #tpu.memory_space<vmem>>, vector<8x128xf32>,
    %c0_144 = arith.constant 0 : index
    %c139_145 = arith.constant 139 : index
    %92 = vector.load %arg9[%c0_144, %c139_145] : memref<16x384xf32, #tpu.memory_space<vmem>>, vector<8x128xf32>
    %c64_146 = arith.constant 64 : index
    %c0_147 = arith.constant 0 : index
    %93 = vector.load %arg10[%c64_146, %c0_147] : memref<72x256xf32, #tpu.memory_space<vmem>>, vector<8x128xf32>
    tpu.vector_store %arg10[%c64_146, %c0_147], %92 {strides = array<i32>} : memref<72x256xf32, #tpu.memory_space<vmem>>, vector<8x128xf32>,
    %c8_148 = arith.constant 8 : index
    %c139_149 = arith.constant 139 : index
    %94 = vector.load %arg9[%c8_148, %c139_149] : memref<16x384xf32, #tpu.memory_space<vmem>>, vector<8x128xf32>
    %c64_150 = arith.constant 64 : index
    %c128_151 = arith.constant 128 : index
    %95 = vector.load %arg10[%c64_150, %c128_151] : memref<72x256xf32, #tpu.memory_space<vmem>>, vector<8x128xf32>
    tpu.vector_store %arg10[%c64_150, %c128_151], %94 {strides = array<i32>} : memref<72x256xf32, #tpu.memory_space<vmem>>, vector<8x128xf32>,
    %c0_152 = arith.constant 0 : index
    %c0_153 = arith.constant 0 : index
    %96 = vector.load %arg6[%c0_152, %c0_153] : memref<8x72xf32, #tpu.memory_space<vmem>>, vector<8x72xf32>
    %c0_154 = arith.constant 0 : index
    %c0_155 = arith.constant 0 : index
    %97 = vector.load %arg10[%c0_154, %c0_155] : memref<72x256xf32, #tpu.memory_space<vmem>>, vector<72x256xf32>
    %cst_156 = arith.constant dense<0.000000e+00> : vector<8x256xf32>
    %98 = tpu.matmul %96, %97, %cst_156 {dimension_numbers = #tpu.dot_dimension_numbers<[1], [0], [0], [1], [0, 0, 1, 1], [], []>} : vector<8x72xf32>, vector<72x256xf32>, vector<8x256xf32> -> vector<8x256xf32>
    %c0_157 = arith.constant 0 : index
    %c0_158 = arith.constant 0 : index
    %99 = vector.load %arg7[%c0_157, %c0_158] : memref<8x1xf32, #tpu.memory_space<vmem>>, vector<8x1xf32>
    %100 = vector.broadcast %99 : vector<8x1xf32> to vector<8x256xf32>
    %101 = arith.addf %98, %100 : vector<8x256xf32>
    %cst_159 = arith.constant 0.000000e+00 : f32
    %102 = vector.broadcast %cst_159 : f32 to vector<8x256xf32>
    %103 = arith.maximumf %101, %102 : vector<8x256xf32>
    %104 = vector.extract_strided_slice %103 {offsets = [0, 0], sizes = [8, 128], strides = [1, 1]} : vector<8x256xf32> to vector<8x128xf32>
    %c0_160 = arith.constant 0 : index
    %c0_161 = arith.constant 0 : index
    %c0_162 = arith.constant 0 : index
    %105 = vector.load %arg8[%c0_160, %c0_161, %c0_162] : memref<2x8x128xf32, #tpu.memory_space<vmem>>, vector<1x8x128xf32>
    %106 = vector.shape_cast %105 : vector<1x8x128xf32> to vector<8x128xf32>
    %107 = vector.shape_cast %104 : vector<8x128xf32> to vector<1x8x128xf32>
    tpu.vector_store %arg8[%c0_160, %c0_161, %c0_162], %107 {strides = array<i32>} : memref<2x8x128xf32, #tpu.memory_space<vmem>>, vector<1x8x128xf32>,
    %108 = vector.extract_strided_slice %103 {offsets = [0, 128], sizes = [8, 128], strides = [1, 1]} : vector<8x256xf32> to vector<8x128xf32>
    %c1 = arith.constant 1 : index
    %c0_163 = arith.constant 0 : index
    %c0_164 = arith.constant 0 : index
    %109 = vector.load %arg8[%c1, %c0_163, %c0_164] : memref<2x8x128xf32, #tpu.memory_space<vmem>>, vector<1x8x128xf32>
    %110 = vector.shape_cast %109 : vector<1x8x128xf32> to vector<8x128xf32>
    %111 = vector.shape_cast %108 : vector<8x128xf32> to vector<1x8x128xf32>
    tpu.vector_store %arg8[%c1, %c0_163, %c0_164], %111 {strides = array<i32>} : memref<2x8x128xf32, #tpu.memory_space<vmem>>, vector<1x8x128xf32>,
    return
  }
  func.func @transform_0(%arg0: i32) -> (i32, i32, i32) {
    %c0_i32 = arith.constant 0 : i32
    %c0_i32_0 = arith.constant 0 : i32
    %c0_i32_1 = arith.constant 0 : i32
    return %arg0, %c0_i32, %c0_i32_0 : i32, i32, i32
  }
  func.func @transform_1(%arg0: i32) -> (i32, i32) {
    %c0_i32 = arith.constant 0 : i32
    %c0_i32_0 = arith.constant 0 : i32
    %c0_i32_1 = arith.constant 0 : i32
    return %c0_i32, %c0_i32_0 : i32, i32
  }
  func.func @transform_2(%arg0: i32) -> (i32, i32) {
    %c0_i32 = arith.constant 0 : i32
    %c0_i32_0 = arith.constant 0 : i32
    %c0_i32_1 = arith.constant 0 : i32
    return %c0_i32, %c0_i32_0 : i32, i32
  }
  func.func @transform_3(%arg0: i32) -> (i32, i32) {
    %c0_i32 = arith.constant 0 : i32
    %c0_i32_0 = arith.constant 0 : i32
    %c0_i32_1 = arith.constant 0 : i32
    return %c0_i32, %c0_i32_0 : i32, i32
  }
  func.func @transform_4(%arg0: i32) -> (i32, i32) {
    %c0_i32 = arith.constant 0 : i32
    %c0_i32_0 = arith.constant 0 : i32
    %c0_i32_1 = arith.constant 0 : i32
    return %c0_i32, %c0_i32_0 : i32, i32
  }
  func.func @transform_5(%arg0: i32) -> (i32, i32) {
    %c0_i32 = arith.constant 0 : i32
    %c0_i32_0 = arith.constant 0 : i32
    %c0_i32_1 = arith.constant 0 : i32
    return %c0_i32, %c0_i32_0 : i32, i32
  }
  func.func @transform_6(%arg0: i32) -> (i32, i32) {
    %c0_i32 = arith.constant 0 : i32
    %c0_i32_0 = arith.constant 0 : i32
    %c0_i32_1 = arith.constant 0 : i32
    return %c0_i32, %c0_i32_0 : i32, i32
  }
  func.func @transform_7(%arg0: i32) -> (i32, i32, i32) {
    %c0_i32 = arith.constant 0 : i32
    %c0_i32_0 = arith.constant 0 : i32
    %c0_i32_1 = arith.constant 0 : i32
    return %arg0, %c0_i32, %c0_i32_0 : i32, i32, i32
  }
}

</mosaic_0001>

<llo_original>
// kernel: tpu_custom_call.1
$region0: #{tpu_custom_call.1}
  #allocation0 [shape = 'u32[]', space=smem, size = 0x4, offset = 0x4, fixed_abs, tag = 'smem constant byte address 0x4 - core index']
  #allocation1 [shape = 'u32[144,128]{1,0:T(1,128)}', space=vmem, size = 0x12000, scoped, tag = 'internal scratch']
  #allocation2 [shape = 'f32[16,384]{1,0:T(8,128)}', space=vmem, size = 0x6000, scoped, tag = 'scratch operand']
  #allocation3 [shape = 'f32[72,256]{1,0:T(8,128)}', space=vmem, size = 0x12000, scoped, tag = 'scratch operand']
  %s0 = inlined_call_operand.hbm [shape: f32[1,16,256], index: 0, kind: input, shape index: {}]
  %s1 = inlined_call_operand.hbm [shape: f32[256,128], index: 1, kind: input, shape index: {}]
  %s2 = inlined_call_operand.vmem [shape: f32[1,256], index: 2, kind: input, shape index: {}]
  %s3 = inlined_call_operand.vmem [shape: f32[8,72], index: 3, kind: input, shape index: {}]
  %s4 = inlined_call_operand.vmem [shape: f32[8,1], index: 4, kind: input, shape index: {}]
  %s5 = inlined_call_operand.vmem [shape: f32[8,72], index: 5, kind: input, shape index: {}]
  %s6 = inlined_call_operand.vmem [shape: f32[8,1], index: 6, kind: input, shape index: {}]
  %s7 = inlined_call_operand.hbm [shape: f32[2,8,128], index: 7, kind: output, shape index: {}]
  %s8 = sld [smem:[#allocation0]]
  $region46: #{tpu_custom_call.1} parent=0
    _
  %s10 = ssub.s32 1, %s8
  %s11 = scalar_select 0, %s10, %s8
  $region1: #{tpu_custom_call.1} parent=0
    #allocation4 [shape = 'u8[16384]{0}', space=vmem, size = 0x4000, scoped, tag = 'input window, operand 0, single buffered']
    #allocation5 [shape = 's32[1]{0}', space=sflag, size = 0x4, scoped, tag = 'scoped memory for tpu_custom_call.1']
    #allocation6 [shape = 's32[1]{0}', space=sflag, size = 0x4, scoped, tag = 'scoped memory for tpu_custom_call.1']
    #allocation7 [shape = 'u8[131072]{0}', space=vmem, size = 0x20000, scoped, tag = 'input window, operand 1, single buffered']
    #allocation8 [shape = 's32[1]{0}', space=sflag, size = 0x4, scoped, tag = 'scoped memory for tpu_custom_call.1']
    #allocation9 [shape = 'u8[8192]{0}', space=vmem, size = 0x2000, scoped, tag = 'output window, operand 0, single buffered']
    %12 = vsyncpa [#allocation5], 0
    %13 = vsyncpa [#allocation8], 0
    %14 = vsyncpa [#allocation6], 0
    // Predicated region
    $region2: #{tpu_custom_call.1} parent=1 // pred_check
      _
    $region3: #{tpu_custom_call.1} parent=1 // pred_check_branch
      %16 = sbr.rel (0) target = $region5
    $region4: #{tpu_custom_call.1} parent=1 // pred_region
      %s18 = ssub.s32 512, 512
      %19 = vsyncadd [#allocation5], %s18
      %s20 = sshll.u32 [#allocation4], 4
      %s21 = int_to_ptr.vmem [resolvable:$true] %s20
      %26 = dma.hbm_to_vmem [thread:$0]  %s0, 512, %s21, [#allocation5], 256, 256, 16
    $region5: #{tpu_custom_call.1} parent=1 // pred_fallthru
      _
    // Predicated region
    $region6: #{tpu_custom_call.1} parent=1 // pred_check
      _
    $region7: #{tpu_custom_call.1} parent=1 // pred_check_branch
      %28 = sbr.rel (0) target = $region9
    $region8: #{tpu_custom_call.1} parent=1 // pred_region
      %s30 = ssub.s32 4096, 4096
      %31 = vsyncadd [#allocation8], %s30
      %s32 = sshll.u32 [#allocation7], 4
      %s33 = int_to_ptr.vmem [resolvable:$true] %s32
      %38 = dma.hbm_to_vmem [thread:$0]  %s1, 4096, %s33, [#allocation8], 128, 128, 8
    $region9: #{tpu_custom_call.1} parent=1 // pred_fallthru
      _
    // Predicated region
    $region10: #{tpu_custom_call.1} parent=1 // pred_check
      _
    $region11: #{tpu_custom_call.1} parent=1 // pred_check_branch
      %40 = sbr.rel (0) target = $region13
    $region12: #{tpu_custom_call.1} parent=1 // pred_region
      _
    $region13: #{tpu_custom_call.1} parent=1 // pred_fallthru
      _
    // Predicated region
    $region14: #{tpu_custom_call.1} parent=1 // pred_check
      _
    $region15: #{tpu_custom_call.1} parent=1 // pred_check_branch
      %42 = sbr.rel (0) target = $region17
    $region16: #{tpu_custom_call.1} parent=1 // pred_region
      _
    $region17: #{tpu_custom_call.1} parent=1 // pred_fallthru
      _
    // Predicated region
    $region18: #{tpu_custom_call.1} parent=1 // pred_check
      _
    $region19: #{tpu_custom_call.1} parent=1 // pred_check_branch
      %44 = sbr.rel (0) target = $region21
    $region20: #{tpu_custom_call.1} parent=1 // pred_region
      _
    $region21: #{tpu_custom_call.1} parent=1 // pred_fallthru
      _
    // Predicated region
    $region22: #{tpu_custom_call.1} parent=1 // pred_check
      _
    $region23: #{tpu_custom_call.1} parent=1 // pred_check_branch
      %46 = sbr.rel (0) target = $region25
    $region24: #{tpu_custom_call.1} parent=1 // pred_region
      _
    $region25: #{tpu_custom_call.1} parent=1 // pred_fallthru
      _
    // Predicated region
    $region26: #{tpu_custom_call.1} parent=1 // pred_check
      _
    $region27: #{tpu_custom_call.1} parent=1 // pred_check_branch
      %48 = sbr.rel (0) target = $region29
    $region28: #{tpu_custom_call.1} parent=1 // pred_region
      _
    $region29: #{tpu_custom_call.1} parent=1 // pred_fallthru
      _
    // Predicated region
    $region30: #{tpu_custom_call.1} parent=1 // pred_check
      _
    $region31: #{tpu_custom_call.1} parent=1 // pred_check_branch
      %50 = sbr.rel (0) target = $region33
    $region32: #{tpu_custom_call.1} parent=1 // pred_region
      %51 = dma.done [#allocation5], 512
    $region33: #{tpu_custom_call.1} parent=1 // pred_fallthru
      _
    // Predicated region
    $region34: #{tpu_custom_call.1} parent=1 // pred_check
      _
    $region35: #{tpu_custom_call.1} parent=1 // pred_check_branch
      %53 = sbr.rel (0) target = $region37
    $region36: #{tpu_custom_call.1} parent=1 // pred_region
      %54 = dma.done [#allocation8], 4096
    $region37: #{tpu_custom_call.1} parent=1 // pred_fallthru
      _
    %55 = vst [vmem:[#allocation2] sm:$0xff] 0.0
    %56 = vst [vmem:[#allocation2 + $0x18] sm:$0xff] 0.0
    %57 = vst [vmem:[#allocation2 + $0x10] sm:$0xff] 0.0
    %58 = vst [vmem:[#allocation2 + $0x28] sm:$0xff] 0.0
    %v59 = vld [vmem:[#allocation4] sm:$0xff]
    %v60 = vld [vmem:[#allocation4 + $0x8] sm:$0xff]
    %v61 = vld [vmem:[#allocation4 + $0x10] sm:$0xff]
    %v62 = vld [vmem:[#allocation4 + $0x18] sm:$0xff]
    %v63 = vld [vmem:[#allocation7] sm:$0xff]
    %v64 = vld [vmem:[#allocation7 + $0x8] sm:$0xff]
    %v65 = vld [vmem:[#allocation7 + $0x10] sm:$0xff]
    %v66 = vld [vmem:[#allocation7 + $0x18] sm:$0xff]
    %v67 = vld [vmem:[#allocation7 + $0x20] sm:$0xff]
    %v68 = vld [vmem:[#allocation7 + $0x28] sm:$0xff]
    %v69 = vld [vmem:[#allocation7 + $0x30] sm:$0xff]
    %v70 = vld [vmem:[#allocation7 + $0x38] sm:$0xff]
    %v71 = vld [vmem:[#allocation7 + $0x40] sm:$0xff]
    %v72 = vld [vmem:[#allocation7 + $0x48] sm:$0xff]
    %v73 = vld [vmem:[#allocation7 + $0x50] sm:$0xff]
    %v74 = vld [vmem:[#allocation7 + $0x58] sm:$0xff]
    %v75 = vld [vmem:[#allocation7 + $0x60] sm:$0xff]
    %v76 = vld [vmem:[#allocation7 + $0x68] sm:$0xff]
    %v77 = vld [vmem:[#allocation7 + $0x70] sm:$0xff]
    %v78 = vld [vmem:[#allocation7 + $0x78] sm:$0xff]
    %v79 = vld [vmem:[#allocation7 + $0x80] sm:$0xff]
    %v80 = vld [vmem:[#allocation7 + $0x88] sm:$0xff]
    %v81 = vld [vmem:[#allocation7 + $0x90] sm:$0xff]
    %v82 = vld [vmem:[#allocation7 + $0x98] sm:$0xff]
    %v83 = vld [vmem:[#allocation7 + $0xa0] sm:$0xff]
    %v84 = vld [vmem:[#allocation7 + $0xa8] sm:$0xff]
    %v85 = vld [vmem:[#allocation7 + $0xb0] sm:$0xff]
    %v86 = vld [vmem:[#allocation7 + $0xb8] sm:$0xff]
    %v87 = vld [vmem:[#allocation7 + $0xc0] sm:$0xff]
    %v88 = vld [vmem:[#allocation7 + $0xc8] sm:$0xff]
    %v89 = vld [vmem:[#allocation7 + $0xd0] sm:$0xff]
    %v90 = vld [vmem:[#allocation7 + $0xd8] sm:$0xff]
    %v91 = vld [vmem:[#allocation7 + $0xe0] sm:$0xff]
    %v92 = vld [vmem:[#allocation7 + $0xe8] sm:$0xff]
    %v93 = vld [vmem:[#allocation7 + $0xf0] sm:$0xff]
    %v94 = vld [vmem:[#allocation7 + $0xf8] sm:$0xff]
    %95 = vmatprep.subr.mxu0 0.0
    %96 = vmatpush1.msra.mxu0 %v63
    %97 = vmatprep.subr.mxu0 0.0
    %98 = vmatpush1.msra.mxu0 %v64
    %99 = vmatprep.subr.mxu0 0.0
    %100 = vmatpush1.msra.mxu0 %v65
    %101 = vmatprep.subr.mxu0 0.0
    %102 = vmatpush1.msra.mxu0 %v66
    %103 = vmatprep.subr.mxu0 0.0
    %104 = vmatpush1.msra.mxu0 %v67
    %105 = vmatprep.subr.mxu0 0.0
    %106 = vmatpush1.msra.mxu0 %v68
    %107 = vmatprep.subr.mxu0 0.0
    %108 = vmatpush1.msra.mxu0 %v69
    %109 = vmatprep.subr.mxu0 0.0
    %110 = vmatpush1.msra.mxu0 %v70
    %111 = vmatprep.subr.mxu0 0.0
    %112 = vmatpush1.msra.mxu0 %v71
    %113 = vmatprep.subr.mxu0 0.0
    %114 = vmatpush1.msra.mxu0 %v72
    %115 = vmatprep.subr.mxu0 0.0
    %116 = vmatpush1.msra.mxu0 %v73
    %117 = vmatprep.subr.mxu0 0.0
    %118 = vmatpush1.msra.mxu0 %v74
    %119 = vmatprep.subr.mxu0 0.0
    %120 = vmatpush1.msra.mxu0 %v75
    %121 = vmatprep.subr.mxu0 0.0
    %122 = vmatpush1.msra.mxu0 %v76
    %123 = vmatprep.subr.mxu0 0.0
    %124 = vmatpush1.msra.mxu0 %v77
    %125 = vmatprep.subr.mxu0 0.0
    %126 = vmatpush1.msra.mxu0 %v78
    %127 = vmatprep.subr.mxu0 0.0
    %128 = vmatpush1.msra.mxu0 %v79
    %129 = vmatprep.subr.mxu0 0.0
    %130 = vmatpush1.msra.mxu0 %v80
    %131 = vmatprep.subr.mxu0 0.0
    %132 = vmatpush1.msra.mxu0 %v81
    %133 = vmatprep.subr.mxu0 0.0
    %134 = vmatpush1.msra.mxu0 %v82
    %135 = vmatprep.subr.mxu0 0.0
    %136 = vmatpush1.msra.mxu0 %v83
    %137 = vmatprep.subr.mxu0 0.0
    %138 = vmatpush1.msra.mxu0 %v84
    %139 = vmatprep.subr.mxu0 0.0
    %140 = vmatpush1.msra.mxu0 %v85
    %141 = vmatprep.subr.mxu0 0.0
    %142 = vmatpush1.msra.mxu0 %v86
    %143 = vmatprep.subr.mxu0 0.0
    %144 = vmatpush1.msra.mxu0 %v87
    %145 = vmatprep.subr.mxu0 0.0
    %146 = vmatpush1.msra.mxu0 %v88
    %147 = vmatprep.subr.mxu0 0.0
    %148 = vmatpush1.msra.mxu0 %v89
    %149 = vmatprep.subr.mxu0 0.0
    %150 = vmatpush1.msra.mxu0 %v90
    %151 = vmatprep.subr.mxu0 0.0
    %152 = vmatpush1.msra.mxu0 %v91
    %153 = vmatprep.subr.mxu0 0.0
    %154 = vmatpush1.msra.mxu0 %v92
    %155 = vmatprep.subr.mxu0 0.0
    %156 = vmatpush1.msra.mxu0 %v93
    %157 = vmatprep.subr.mxu0 0.0
    %158 = vmatpush1.msra.mxu0 %v94
    %159 = vmatprep.mubr.f32.mxu0 %v60
    %160 = vmatmul.mubr.f32.gmra.mrb[0].mxu0 %v59
    %v161 = vpop.f32.mrb[0].mxu0
    %v162 = vadd.f32 0.0, %v161
    %v163 = vpop.f32.mrb[0].mxu0
    %164 = vmatprep.mubr.f32.mxu0 %v62
    %165 = vmatmul.mubr.f32.gmra.mrb[0].mxu0 %v61
    %v166 = vpop.f32.mrb[0].mxu0
    %v167 = vadd.f32 0.0, %v166
    %v168 = vpop.f32.mrb[0].mxu0
    %169 = vdwg.mxu0
    %170 = vst [vmem:[#allocation2 + $0x8] sm:$0xff] %v162
    %171 = vst [vmem:[#allocation2 + $0x20] sm:$0xff] %v167
    %v172 = vld [vmem:[%s2] sm:$0x3]
    %v173 = vld [vmem:[#allocation2] sm:$0xff]
    %v174 = vld [vmem:[#allocation2 + $0x8] sm:$0xff]
    %177 = vrot.lane.b32.xlu0 %v173, 11
    %v178 = vpop.permute.xlu0 %177
    %179 = vrot.lane.b32.xlu0 %v174, 11
    %v180 = vpop.permute.xlu0 %179
    %vm181 = vcmask 89088
    %v182 = vsel %vm181, %v178, %v180
    %184 = vst [vmem:[#allocation3] sm:$0xff] %v182
    %v185 = vld [vmem:[#allocation2 + $0x18] sm:$0xff]
    %v186 = vld [vmem:[#allocation2 + $0x20] sm:$0xff]
    %189 = vrot.lane.b32.xlu0 %v185, 11
    %v190 = vpop.permute.xlu0 %189
    %191 = vrot.lane.b32.xlu0 %v186, 11
    %v192 = vpop.permute.xlu0 %191
    %v193 = vsel %vm181, %v190, %v192
    %195 = vst [vmem:[#allocation3 + $0x8] sm:$0xff] %v193
    %v196 = vld [vmem:[#allocation2] sm:$0xff]
    %v197 = vld [vmem:[#allocation2 + $0x8] sm:$0xff]
    %200 = vrot.lane.b32.xlu0 %v196, 10
    %v201 = vpop.permute.xlu0 %200
    %202 = vrot.lane.b32.xlu0 %v197, 10
    %v203 = vpop.permute.xlu0 %202
    %vm204 = vcmask 80896
    %v205 = vsel %vm204, %v201, %v203
    %207 = vst [vmem:[#allocation3 + $0x10] sm:$0xff] %v205
    %v208 = vld [vmem:[#allocation2 + $0x18] sm:$0xff]
    %v209 = vld [vmem:[#allocation2 + $0x20] sm:$0xff]
    %212 = vrot.lane.b32.xlu0 %v208, 10
    %v213 = vpop.permute.xlu0 %212
    %214 = vrot.lane.b32.xlu0 %v209, 10
    %v215 = vpop.permute.xlu0 %214
    %v216 = vsel %vm204, %v213, %v215
    %218 = vst [vmem:[#allocation3 + $0x18] sm:$0xff] %v216
    %v219 = vld [vmem:[#allocation2] sm:$0xff]
    %v220 = vld [vmem:[#allocation2 + $0x8] sm:$0xff]
    %223 = vrot.lane.b32.xlu0 %v219, 9
    %v224 = vpop.permute.xlu0 %223
    %225 = vrot.lane.b32.xlu0 %v220, 9
    %v226 = vpop.permute.xlu0 %225
    %vm227 = vcmask 72704
    %v228 = vsel %vm227, %v224, %v226
    %230 = vst [vmem:[#allocation3 + $0x20] sm:$0xff] %v228
    %v231 = vld [vmem:[#allocation2 + $0x18] sm:$0xff]
    %v232 = vld [vmem:[#allocation2 + $0x20] sm:$0xff]
    %235 = vrot.lane.b32.xlu0 %v231, 9
    %v236 = vpop.permute.xlu0 %235
    %237 = vrot.lane.b32.xlu0 %v232, 9
    %v238 = vpop.permute.xlu0 %237
    %v239 = vsel %vm227, %v236, %v238
    %241 = vst [vmem:[#allocation3 + $0x28] sm:$0xff] %v239
    %v242 = vld [vmem:[#allocation2] sm:$0xff]
    %v243 = vld [vmem:[#allocation2 + $0x8] sm:$0xff]
    %246 = vrot.lane.b32.xlu0 %v242, 1
    %v247 = vpop.permute.xlu0 %246
    %248 = vrot.lane.b32.xlu0 %v243, 1
    %v249 = vpop.permute.xlu0 %248
    %vm250 = vcmask 7168
    %v251 = vsel %vm250, %v247, %v249
    %253 = vst [vmem:[#allocation3 + $0x30] sm:$0xff] %v251
    %v254 = vld [vmem:[#allocation2 + $0x18] sm:$0xff]
    %v255 = vld [vmem:[#allocation2 + $0x20] sm:$0xff]
    %258 = vrot.lane.b32.xlu0 %v254, 1
    %v259 = vpop.permute.xlu0 %258
    %260 = vrot.lane.b32.xlu0 %v255, 1
    %v261 = vpop.permute.xlu0 %260
    %v262 = vsel %vm250, %v259, %v261
    %264 = vst [vmem:[#allocation3 + $0x38] sm:$0xff] %v262
    %v265 = vld [vmem:[#allocation2 + $0x8] sm:$0xff]
    %266 = vst [vmem:[#allocation3 + $0x40] sm:$0xff] %v265
    %v267 = vld [vmem:[#allocation2 + $0x20] sm:$0xff]
    %268 = vst [vmem:[#allocation3 + $0x48] sm:$0xff] %v267
    %v269 = vld [vmem:[#allocation2 + $0x8] sm:$0xff]
    %v270 = vld [vmem:[#allocation2 + $0x10] sm:$0xff]
    %273 = vrot.lane.b32.xlu0 %v269, 127
    %v274 = vpop.permute.xlu0 %273
    %275 = vrot.lane.b32.xlu0 %v270, 127
    %v276 = vpop.permute.xlu0 %275
    %vm277 = vcmask 1039360
    %v278 = vsel %vm277, %v274, %v276
    %280 = vst [vmem:[#allocation3 + $0x50] sm:$0xff] %v278
    %v281 = vld [vmem:[#allocation2 + $0x20] sm:$0xff]
    %v282 = vld [vmem:[#allocation2 + $0x28] sm:$0xff]
    %285 = vrot.lane.b32.xlu0 %v281, 127
    %v286 = vpop.permute.xlu0 %285
    %287 = vrot.lane.b32.xlu0 %v282, 127
    %v288 = vpop.permute.xlu0 %287
    %v289 = vsel %vm277, %v286, %v288
    %291 = vst [vmem:[#allocation3 + $0x58] sm:$0xff] %v289
    %v292 = vld [vmem:[#allocation2 + $0x8] sm:$0xff]
    %v293 = vld [vmem:[#allocation2 + $0x10] sm:$0xff]
    %296 = vrot.lane.b32.xlu0 %v292, 119
    %v297 = vpop.permute.xlu0 %296
    %298 = vrot.lane.b32.xlu0 %v293, 119
    %v299 = vpop.permute.xlu0 %298
    %vm300 = vcmask 973824
    %v301 = vsel %vm300, %v297, %v299
    %303 = vst [vmem:[#allocation3 + $0x60] sm:$0xff] %v301
    %v304 = vld [vmem:[#allocation2 + $0x20] sm:$0xff]
    %v305 = vld [vmem:[#allocation2 + $0x28] sm:$0xff]
    %308 = vrot.lane.b32.xlu0 %v304, 119
    %v309 = vpop.permute.xlu0 %308
    %310 = vrot.lane.b32.xlu0 %v305, 119
    %v311 = vpop.permute.xlu0 %310
    %v312 = vsel %vm300, %v309, %v311
    %314 = vst [vmem:[#allocation3 + $0x68] sm:$0xff] %v312
    %v315 = vld [vmem:[#allocation2 + $0x8] sm:$0xff]
    %v316 = vld [vmem:[#allocation2 + $0x10] sm:$0xff]
    %319 = vrot.lane.b32.xlu0 %v315, 118
    %v320 = vpop.permute.xlu0 %319
    %321 = vrot.lane.b32.xlu0 %v316, 118
    %v322 = vpop.permute.xlu0 %321
    %vm323 = vcmask 965632
    %v324 = vsel %vm323, %v320, %v322
    %326 = vst [vmem:[#allocation3 + $0x70] sm:$0xff] %v324
    %v327 = vld [vmem:[#allocation2 + $0x20] sm:$0xff]
    %v328 = vld [vmem:[#allocation2 + $0x28] sm:$0xff]
    %331 = vrot.lane.b32.xlu0 %v327, 118
    %v332 = vpop.permute.xlu0 %331
    %333 = vrot.lane.b32.xlu0 %v328, 118
    %v334 = vpop.permute.xlu0 %333
    %v335 = vsel %vm323, %v332, %v334
    %337 = vst [vmem:[#allocation3 + $0x78] sm:$0xff] %v335
    %v338 = vld [vmem:[#allocation2 + $0x8] sm:$0xff]
    %v339 = vld [vmem:[#allocation2 + $0x10] sm:$0xff]
    %342 = vrot.lane.b32.xlu0 %v338, 117
    %v343 = vpop.permute.xlu0 %342
    %344 = vrot.lane.b32.xlu0 %v339, 117
    %v345 = vpop.permute.xlu0 %344
    %vm346 = vcmask 957440
    %v347 = vsel %vm346, %v343, %v345
    %349 = vst [vmem:[#allocation3 + $0x80] sm:$0xff] %v347
    %v350 = vld [vmem:[#allocation2 + $0x20] sm:$0xff]
    %v351 = vld [vmem:[#allocation2 + $0x28] sm:$0xff]
    %354 = vrot.lane.b32.xlu0 %v350, 117
    %v355 = vpop.permute.xlu0 %354
    %356 = vrot.lane.b32.xlu0 %v351, 117
    %v357 = vpop.permute.xlu0 %356
    %v358 = vsel %vm346, %v355, %v357
    %360 = vst [vmem:[#allocation3 + $0x88] sm:$0xff] %v358
    %v361 = vld [vmem:[%s3] sm:$0xff]
    %v362 = vld [vmem:[#allocation3] sm:$0xff]
    %v363 = vld [vmem:[#allocation3 + $0x8] sm:$0xff]
    %v364 = vld [vmem:[#allocation3 + $0x10] sm:$0xff]
    %v365 = vld [vmem:[#allocation3 + $0x18] sm:$0xff]
    %v366 = vld [vmem:[#allocation3 + $0x20] sm:$0xff]
    %v367 = vld [vmem:[#allocation3 + $0x28] sm:$0xff]
    %v368 = vld [vmem:[#allocation3 + $0x30] sm:$0xff]
    %v369 = vld [vmem:[#allocation3 + $0x38] sm:$0xff]
    %v370 = vld [vmem:[#allocation3 + $0x40] sm:$0xff]
    %v371 = vld [vmem:[#allocation3 + $0x48] sm:$0xff]
    %v372 = vld [vmem:[#allocation3 + $0x50] sm:$0xff]
    %v373 = vld [vmem:[#allocation3 + $0x58] sm:$0xff]
    %v374 = vld [vmem:[#allocation3 + $0x60] sm:$0xff]
    %v375 = vld [vmem:[#allocation3 + $0x68] sm:$0xff]
    %v376 = vld [vmem:[#allocation3 + $0x70] sm:$0xff]
    %v377 = vld [vmem:[#allocation3 + $0x78] sm:$0xff]
    %v378 = vld [vmem:[#allocation3 + $0x80] sm:$0xff]
    %v379 = vld [vmem:[#allocation3 + $0x88] sm:$0xff]
    %v380 = vld [vmem:[%s4] sm:$0xff]
    %382 = vset.pattern.permute.xlu0 0
    %383 = vperm.xlu0 %382, %v380
    %v384 = vpop.permute.xlu0 %383
    %vm386 = vcmask 588800
    %v388 = vsel %vm386, %v361, 0
    %390 = vmatprep.subr.mxu0 %v363
    %391 = vmatpush1.msra.mxu0 %v362
    %392 = vmatprep.subr.mxu0 %v365
    %393 = vmatpush1.msra.mxu0 %v364
    %394 = vmatprep.subr.mxu0 %v367
    %395 = vmatpush1.msra.mxu0 %v366
    %396 = vmatprep.subr.mxu0 %v369
    %397 = vmatpush1.msra.mxu0 %v368
    %398 = vmatprep.subr.mxu0 %v371
    %399 = vmatpush1.msra.mxu0 %v370
    %400 = vmatprep.subr.mxu0 %v373
    %401 = vmatpush1.msra.mxu0 %v372
    %402 = vmatprep.subr.mxu0 %v375
    %403 = vmatpush1.msra.mxu0 %v374
    %404 = vmatprep.subr.mxu0 %v377
    %405 = vmatpush1.msra.mxu0 %v376
    %406 = vmatprep.subr.mxu0 %v379
    %407 = vmatpush1.msra.mxu0 %v378
    %408 = vmatprep.subr.mxu0 0.0
    %409 = vmatpush1.msra.mxu0 0.0
    %410 = vmatprep.subr.mxu0 0.0
    %411 = vmatpush1.msra.mxu0 0.0
    %412 = vmatprep.subr.mxu0 0.0
    %413 = vmatpush1.msra.mxu0 0.0
    %414 = vmatprep.subr.mxu0 0.0
    %415 = vmatpush1.msra.mxu0 0.0
    %416 = vmatprep.subr.mxu0 0.0
    %417 = vmatpush1.msra.mxu0 0.0
    %418 = vmatprep.subr.mxu0 0.0
    %419 = vmatpush1.msra.mxu0 0.0
    %420 = vmatprep.subr.mxu0 0.0
    %421 = vmatpush1.msra.mxu0 0.0
    %422 = vmatprep.subr.mxu0 0.0
    %423 = vmatpush1.msra.mxu0 0.0
    %424 = vmatprep.subr.mxu0 0.0
    %425 = vmatpush1.msra.mxu0 0.0
    %426 = vmatprep.subr.mxu0 0.0
    %427 = vmatpush1.msra.mxu0 0.0
    %428 = vmatprep.subr.mxu0 0.0
    %429 = vmatpush1.msra.mxu0 0.0
    %430 = vmatprep.subr.mxu0 0.0
    %431 = vmatpush1.msra.mxu0 0.0
    %432 = vmatprep.subr.mxu0 0.0
    %433 = vmatpush1.msra.mxu0 0.0
    %434 = vmatprep.subr.mxu0 0.0
    %435 = vmatpush1.msra.mxu0 0.0
    %436 = vmatprep.subr.mxu0 0.0
    %437 = vmatpush1.msra.mxu0 0.0
    %438 = vmatprep.subr.mxu0 0.0
    %439 = vmatpush1.msra.mxu0 0.0
    %440 = vmatprep.subr.mxu0 0.0
    %441 = vmatpush1.msra.mxu0 0.0
    %442 = vmatprep.subr.mxu0 0.0
    %443 = vmatpush1.msra.mxu0 0.0
    %444 = vmatprep.subr.mxu0 0.0
    %445 = vmatpush1.msra.mxu0 0.0
    %446 = vmatprep.subr.mxu0 0.0
    %447 = vmatpush1.msra.mxu0 0.0
    %448 = vmatprep.subr.mxu0 0.0
    %449 = vmatpush1.msra.mxu0 0.0
    %450 = vmatprep.subr.mxu0 0.0
    %451 = vmatpush1.msra.mxu0 0.0
    %452 = vmatprep.subr.mxu0 0.0
    %453 = vmatpush1.msra.mxu0 0.0
    %454 = vmatprep.mubr.f32.mxu0 0.0
    %455 = vmatmul.mubr.f32.gmra.mrb[0].mxu0 %v388
    %v456 = vpop.f32.mrb[0].mxu0
    %v457 = vadd.f32 %v384, %v456
    %v458 = vpop.f32.mrb[0].mxu0
    %v459 = vadd.f32 %v384, %v458
    %460 = vdwg.mxu0
    %v461 = vmax.f32 %v457, 0.0
    %v462 = vmax.f32 %v459, 0.0
    %v464 = vlaneseq
    %v465 = vshrl.u32 %v464, 7
    %v466 = vsub.s32 0, %v465
    %v467 = vrot.slane %v172, %v466
    %v468 = vlaneseq
    %v469 = vshrl.u32 %v468, 7
    %v470 = vsub.s32 1, %v469
    %v471 = vrot.slane %v172, %v470
    %v474 = vmul.f32 %v461, %v467
    %v475 = vmul.f32 %v462, %v471
    %476 = vst [vmem:[#allocation2 + $0x8] sm:$0xff] %v474
    %477 = vst [vmem:[#allocation2 + $0x20] sm:$0xff] %v475
    %v478 = vld [vmem:[#allocation2] sm:$0xff]
    %v479 = vld [vmem:[#allocation2 + $0x8] sm:$0xff]
    %482 = vrot.lane.b32.xlu0 %v478, 11
    %v483 = vpop.permute.xlu0 %482
    %484 = vrot.lane.b32.xlu0 %v479, 11
    %v485 = vpop.permute.xlu0 %484
    %v486 = vsel %vm181, %v483, %v485
    %488 = vst [vmem:[#allocation3] sm:$0xff] %v486
    %v489 = vld [vmem:[#allocation2 + $0x18] sm:$0xff]
    %v490 = vld [vmem:[#allocation2 + $0x20] sm:$0xff]
    %493 = vrot.lane.b32.xlu0 %v489, 11
    %v494 = vpop.permute.xlu0 %493
    %495 = vrot.lane.b32.xlu0 %v490, 11
    %v496 = vpop.permute.xlu0 %495
    %v497 = vsel %vm181, %v494, %v496
    %499 = vst [vmem:[#allocation3 + $0x8] sm:$0xff] %v497
    %v500 = vld [vmem:[#allocation2] sm:$0xff]
    %v501 = vld [vmem:[#allocation2 + $0x8] sm:$0xff]
    %504 = vrot.lane.b32.xlu0 %v500, 10
    %v505 = vpop.permute.xlu0 %504
    %506 = vrot.lane.b32.xlu0 %v501, 10
    %v507 = vpop.permute.xlu0 %506
    %v508 = vsel %vm204, %v505, %v507
    %510 = vst [vmem:[#allocation3 + $0x10] sm:$0xff] %v508
    %v511 = vld [vmem:[#allocation2 + $0x18] sm:$0xff]
    %v512 = vld [vmem:[#allocation2 + $0x20] sm:$0xff]
    %515 = vrot.lane.b32.xlu0 %v511, 10
    %v516 = vpop.permute.xlu0 %515
    %517 = vrot.lane.b32.xlu0 %v512, 10
    %v518 = vpop.permute.xlu0 %517
    %v519 = vsel %vm204, %v516, %v518
    %521 = vst [vmem:[#allocation3 + $0x18] sm:$0xff] %v519
    %v522 = vld [vmem:[#allocation2] sm:$0xff]
    %v523 = vld [vmem:[#allocation2 + $0x8] sm:$0xff]
    %526 = vrot.lane.b32.xlu0 %v522, 9
    %v527 = vpop.permute.xlu0 %526
    %528 = vrot.lane.b32.xlu0 %v523, 9
    %v529 = vpop.permute.xlu0 %528
    %v530 = vsel %vm227, %v527, %v529
    %532 = vst [vmem:[#allocation3 + $0x20] sm:$0xff] %v530
    %v533 = vld [vmem:[#allocation2 + $0x18] sm:$0xff]
    %v534 = vld [vmem:[#allocation2 + $0x20] sm:$0xff]
    %537 = vrot.lane.b32.xlu0 %v533, 9
    %v538 = vpop.permute.xlu0 %537
    %539 = vrot.lane.b32.xlu0 %v534, 9
    %v540 = vpop.permute.xlu0 %539
    %v541 = vsel %vm227, %v538, %v540
    %543 = vst [vmem:[#allocation3 + $0x28] sm:$0xff] %v541
    %v544 = vld [vmem:[#allocation2] sm:$0xff]
    %v545 = vld [vmem:[#allocation2 + $0x8] sm:$0xff]
    %548 = vrot.lane.b32.xlu0 %v544, 1
    %v549 = vpop.permute.xlu0 %548
    %550 = vrot.lane.b32.xlu0 %v545, 1
    %v551 = vpop.permute.xlu0 %550
    %v552 = vsel %vm250, %v549, %v551
    %554 = vst [vmem:[#allocation3 + $0x30] sm:$0xff] %v552
    %v555 = vld [vmem:[#allocation2 + $0x18] sm:$0xff]
    %v556 = vld [vmem:[#allocation2 + $0x20] sm:$0xff]
    %559 = vrot.lane.b32.xlu0 %v555, 1
    %v560 = vpop.permute.xlu0 %559
    %561 = vrot.lane.b32.xlu0 %v556, 1
    %v562 = vpop.permute.xlu0 %561
    %v563 = vsel %vm250, %v560, %v562
    %565 = vst [vmem:[#allocation3 + $0x38] sm:$0xff] %v563
    %v566 = vld [vmem:[#allocation2 + $0x8] sm:$0xff]
    %567 = vst [vmem:[#allocation3 + $0x40] sm:$0xff] %v566
    %v568 = vld [vmem:[#allocation2 + $0x20] sm:$0xff]
    %569 = vst [vmem:[#allocation3 + $0x48] sm:$0xff] %v568
    %v570 = vld [vmem:[#allocation2 + $0x8] sm:$0xff]
    %v571 = vld [vmem:[#allocation2 + $0x10] sm:$0xff]
    %574 = vrot.lane.b32.xlu0 %v570, 127
    %v575 = vpop.permute.xlu0 %574
    %576 = vrot.lane.b32.xlu0 %v571, 127
    %v577 = vpop.permute.xlu0 %576
    %v578 = vsel %vm277, %v575, %v577
    %580 = vst [vmem:[#allocation3 + $0x50] sm:$0xff] %v578
    %v581 = vld [vmem:[#allocation2 + $0x20] sm:$0xff]
    %v582 = vld [vmem:[#allocation2 + $0x28] sm:$0xff]
    %585 = vrot.lane.b32.xlu0 %v581, 127
    %v586 = vpop.permute.xlu0 %585
    %587 = vrot.lane.b32.xlu0 %v582, 127
    %v588 = vpop.permute.xlu0 %587
    %v589 = vsel %vm277, %v586, %v588
    %591 = vst [vmem:[#allocation3 + $0x58] sm:$0xff] %v589
    %v592 = vld [vmem:[#allocation2 + $0x8] sm:$0xff]
    %v593 = vld [vmem:[#allocation2 + $0x10] sm:$0xff]
    %596 = vrot.lane.b32.xlu0 %v592, 119
    %v597 = vpop.permute.xlu0 %596
    %598 = vrot.lane.b32.xlu0 %v593, 119
    %v599 = vpop.permute.xlu0 %598
    %v600 = vsel %vm300, %v597, %v599
    %602 = vst [vmem:[#allocation3 + $0x60] sm:$0xff] %v600
    %v603 = vld [vmem:[#allocation2 + $0x20] sm:$0xff]
    %v604 = vld [vmem:[#allocation2 + $0x28] sm:$0xff]
    %607 = vrot.lane.b32.xlu0 %v603, 119
    %v608 = vpop.permute.xlu0 %607
    %609 = vrot.lane.b32.xlu0 %v604, 119
    %v610 = vpop.permute.xlu0 %609
    %v611 = vsel %vm300, %v608, %v610
    %613 = vst [vmem:[#allocation3 + $0x68] sm:$0xff] %v611
    %v614 = vld [vmem:[#allocation2 + $0x8] sm:$0xff]
    %v615 = vld [vmem:[#allocation2 + $0x10] sm:$0xff]
    %618 = vrot.lane.b32.xlu0 %v614, 118
    %v619 = vpop.permute.xlu0 %618
    %620 = vrot.lane.b32.xlu0 %v615, 118
    %v621 = vpop.permute.xlu0 %620
    %v622 = vsel %vm323, %v619, %v621
    %624 = vst [vmem:[#allocation3 + $0x70] sm:$0xff] %v622
    %v625 = vld [vmem:[#allocation2 + $0x20] sm:$0xff]
    %v626 = vld [vmem:[#allocation2 + $0x28] sm:$0xff]
    %629 = vrot.lane.b32.xlu0 %v625, 118
    %v630 = vpop.permute.xlu0 %629
    %631 = vrot.lane.b32.xlu0 %v626, 118
    %v632 = vpop.permute.xlu0 %631
    %v633 = vsel %vm323, %v630, %v632
    %635 = vst [vmem:[#allocation3 + $0x78] sm:$0xff] %v633
    %v636 = vld [vmem:[#allocation2 + $0x8] sm:$0xff]
    %v637 = vld [vmem:[#allocation2 + $0x10] sm:$0xff]
    %640 = vrot.lane.b32.xlu0 %v636, 117
    %v641 = vpop.permute.xlu0 %640
    %642 = vrot.lane.b32.xlu0 %v637, 117
    %v643 = vpop.permute.xlu0 %642
    %v644 = vsel %vm346, %v641, %v643
    %646 = vst [vmem:[#allocation3 + $0x80] sm:$0xff] %v644
    %v647 = vld [vmem:[#allocation2 + $0x20] sm:$0xff]
    %v648 = vld [vmem:[#allocation2 + $0x28] sm:$0xff]
    %651 = vrot.lane.b32.xlu0 %v647, 117
    %v652 = vpop.permute.xlu0 %651
    %653 = vrot.lane.b32.xlu0 %v648, 117
    %v654 = vpop.permute.xlu0 %653
    %v655 = vsel %vm346, %v652, %v654
    %657 = vst [vmem:[#allocation3 + $0x88] sm:$0xff] %v655
    %v658 = vld [vmem:[%s5] sm:$0xff]
    %v659 = vld [vmem:[#allocation3] sm:$0xff]
    %v660 = vld [vmem:[#allocation3 + $0x8] sm:$0xff]
    %v661 = vld [vmem:[#allocation3 + $0x10] sm:$0xff]
    %v662 = vld [vmem:[#allocation3 + $0x18] sm:$0xff]
    %v663 = vld [vmem:[#allocation3 + $0x20] sm:$0xff]
    %v664 = vld [vmem:[#allocation3 + $0x28] sm:$0xff]
    %v665 = vld [vmem:[#allocation3 + $0x30] sm:$0xff]
    %v666 = vld [vmem:[#allocation3 + $0x38] sm:$0xff]
    %v667 = vld [vmem:[#allocation3 + $0x40] sm:$0xff]
    %v668 = vld [vmem:[#allocation3 + $0x48] sm:$0xff]
    %v669 = vld [vmem:[#allocation3 + $0x50] sm:$0xff]
    %v670 = vld [vmem:[#allocation3 + $0x58] sm:$0xff]
    %v671 = vld [vmem:[#allocation3 + $0x60] sm:$0xff]
    %v672 = vld [vmem:[#allocation3 + $0x68] sm:$0xff]
    %v673 = vld [vmem:[#allocation3 + $0x70] sm:$0xff]
    %v674 = vld [vmem:[#allocation3 + $0x78] sm:$0xff]
    %v675 = vld [vmem:[#allocation3 + $0x80] sm:$0xff]
    %v676 = vld [vmem:[#allocation3 + $0x88] sm:$0xff]
    %v677 = vld [vmem:[%s6] sm:$0xff]
    %679 = vset.pattern.permute.xlu0 0
    %680 = vperm.xlu0 %679, %v677
    %v681 = vpop.permute.xlu0 %680
    %v684 = vsel %vm386, %v658, 0
    %686 = vmatprep.subr.mxu0 %v660
    %687 = vmatpush1.msra.mxu0 %v659
    %688 = vmatprep.subr.mxu0 %v662
    %689 = vmatpush1.msra.mxu0 %v661
    %690 = vmatprep.subr.mxu0 %v664
    %691 = vmatpush1.msra.mxu0 %v663
    %692 = vmatprep.subr.mxu0 %v666
    %693 = vmatpush1.msra.mxu0 %v665
    %694 = vmatprep.subr.mxu0 %v668
    %695 = vmatpush1.msra.mxu0 %v667
    %696 = vmatprep.subr.mxu0 %v670
    %697 = vmatpush1.msra.mxu0 %v669
    %698 = vmatprep.subr.mxu0 %v672
    %699 = vmatpush1.msra.mxu0 %v671
    %700 = vmatprep.subr.mxu0 %v674
    %701 = vmatpush1.msra.mxu0 %v673
    %702 = vmatprep.subr.mxu0 %v676
    %703 = vmatpush1.msra.mxu0 %v675
    %704 = vmatprep.subr.mxu0 0.0
    %705 = vmatpush1.msra.mxu0 0.0
    %706 = vmatprep.subr.mxu0 0.0
    %707 = vmatpush1.msra.mxu0 0.0
    %708 = vmatprep.subr.mxu0 0.0
    %709 = vmatpush1.msra.mxu0 0.0
    %710 = vmatprep.subr.mxu0 0.0
    %711 = vmatpush1.msra.mxu0 0.0
    %712 = vmatprep.subr.mxu0 0.0
    %713 = vmatpush1.msra.mxu0 0.0
    %714 = vmatprep.subr.mxu0 0.0
    %715 = vmatpush1.msra.mxu0 0.0
    %716 = vmatprep.subr.mxu0 0.0
    %717 = vmatpush1.msra.mxu0 0.0
    %718 = vmatprep.subr.mxu0 0.0
    %719 = vmatpush1.msra.mxu0 0.0
    %720 = vmatprep.subr.mxu0 0.0
    %721 = vmatpush1.msra.mxu0 0.0
    %722 = vmatprep.subr.mxu0 0.0
    %723 = vmatpush1.msra.mxu0 0.0
    %724 = vmatprep.subr.mxu0 0.0
    %725 = vmatpush1.msra.mxu0 0.0
    %726 = vmatprep.subr.mxu0 0.0
    %727 = vmatpush1.msra.mxu0 0.0
    %728 = vmatprep.subr.mxu0 0.0
    %729 = vmatpush1.msra.mxu0 0.0
    %730 = vmatprep.subr.mxu0 0.0
    %731 = vmatpush1.msra.mxu0 0.0
    %732 = vmatprep.subr.mxu0 0.0
    %733 = vmatpush1.msra.mxu0 0.0
    %734 = vmatprep.subr.mxu0 0.0
    %735 = vmatpush1.msra.mxu0 0.0
    %736 = vmatprep.subr.mxu0 0.0
    %737 = vmatpush1.msra.mxu0 0.0
    %738 = vmatprep.subr.mxu0 0.0
    %739 = vmatpush1.msra.mxu0 0.0
    %740 = vmatprep.subr.mxu0 0.0
    %741 = vmatpush1.msra.mxu0 0.0
    %742 = vmatprep.subr.mxu0 0.0
    %743 = vmatpush1.msra.mxu0 0.0
    %744 = vmatprep.subr.mxu0 0.0
    %745 = vmatpush1.msra.mxu0 0.0
    %746 = vmatprep.subr.mxu0 0.0
    %747 = vmatpush1.msra.mxu0 0.0
    %748 = vmatprep.subr.mxu0 0.0
    %749 = vmatpush1.msra.mxu0 0.0
    %750 = vmatprep.mubr.f32.mxu0 0.0
    %751 = vmatmul.mubr.f32.gmra.mrb[0].mxu0 %v684
    %v752 = vpop.f32.mrb[0].mxu0
    %v753 = vadd.f32 %v681, %v752
    %v754 = vpop.f32.mrb[0].mxu0
    %v755 = vadd.f32 %v681, %v754
    %756 = vdwg.mxu0
    %v757 = vmax.f32 %v753, 0.0
    %v758 = vmax.f32 %v755, 0.0
    %759 = vst [vmem:[#allocation9] sm:$0xff] %v757
    %s760 = scalar_lea.vmem [#allocation9], 8
    %761 = vst [vmem:[%s760] sm:$0xff] %v758
    // Predicated region
    $region38: #{tpu_custom_call.1} parent=1 // pred_check
      _
    $region39: #{tpu_custom_call.1} parent=1 // pred_check_branch
      %763 = sbr.rel (0) target = $region41
    $region40: #{tpu_custom_call.1} parent=1 // pred_region
      %s765 = ssub.s32 256, 256
      %766 = vsyncadd [#allocation6], %s765
      %s767 = sshll.u32 [#allocation9], 4
      %s768 = int_to_ptr.vmem [resolvable:$true] %s767
      %773 = dma.vmem_to_hbm [thread:$0]  %s768, 256, %s7, [#allocation6], 128, 128, 8
    $region41: #{tpu_custom_call.1} parent=1 // pred_fallthru
      _
    // Predicated region
    $region42: #{tpu_custom_call.1} parent=1 // pred_check
      _
    $region43: #{tpu_custom_call.1} parent=1 // pred_check_branch
      %775 = sbr.rel (0) target = $region45
    $region44: #{tpu_custom_call.1} parent=1 // pred_region
      %776 = dma.done [#allocation6], 256
    $region45: #{tpu_custom_call.1} parent=1 // pred_fallthru
      _
    %777 = vsyncpa [#allocation5], 1
    %778 = vsyncpa [#allocation8], 1
    %779 = vsyncpa [#allocation6], 1

</llo_original>
